<compile_context>
chip_gen: v5e
topology: v5e:2x2
jax: 0.10.0
libtpu: 0.0.40
codegen_flags: <defaults>
</compile_context>

<pallas_src>
import functools

import jax
import jax.numpy as jnp
from jax.experimental import pallas as pl
from jax.experimental.pallas import tpu as pltpu


def _fusion_kernel(x_ref, o_ref, *, view_num, C, inv_view):
    # x_ref: (TILE_CHUNK, view_num * C)  lane-dense 2-D input block
    # o_ref: (TILE_CHUNK, C)             output block
    # Accumulate view-by-view into an f32 accumulator (keeps the f32 working
    # set to one output tile + one view slice instead of the whole tile).
    acc = x_ref[:, 0:C].astype(jnp.float32)
    for v in range(1, view_num):
        acc = acc + x_ref[:, v * C:(v + 1) * C].astype(jnp.float32)
    o_ref[...] = (acc * inv_view).astype(o_ref.dtype)


def _choose_tile_chunk(chunk_size, view_num, C, itemsize):
    # Per chunk-row VMEM cost: double-buffered input slab + double-buffered
    # output slab + one f32 accumulator row. Budget well under the scoped
    # VMEM limit on every generation (v5e default 16 MiB, v6e/v7x 32 MiB).
    vmem_budget = 24 * 1024 * 1024
    per_row = 2 * view_num * C * itemsize + 2 * C * itemsize + C * 4
    tile = vmem_budget // max(per_row, 1)
    tile = int(max(8, min(2048, (tile // 8) * 8)))
    if chunk_size <= tile:
        # Single block covering the full chunk dim is always a legal block
        # shape (block dim == full array dim), no padding needed.
        return chunk_size
    return tile  # multiple of 8 -> legal tiled sublane dim


def multiview_feature_fusion(features, pids, view_num):
    size, C = features.shape
    assert size % view_num == 0, (
        f"features.shape[0]={size} must be a multiple of view_num={view_num}")
    chunk_size = size // view_num

    # Lane-dense 2-D layout for the kernel: (chunk_size, view_num * C).
    x2d = features.reshape(chunk_size, view_num * C)

    itemsize = jnp.dtype(features.dtype).itemsize
    tile_chunk = _choose_tile_chunk(chunk_size, view_num, C, itemsize)

    # Pad the chunk axis so it tiles evenly; padded rows are sliced off after.
    n_tiles = pl.cdiv(chunk_size, tile_chunk)
    padded_chunk = n_tiles * tile_chunk
    if padded_chunk != chunk_size:
        x2d = jnp.pad(x2d, ((0, padded_chunk - chunk_size), (0, 0)))

    kernel = functools.partial(
        _fusion_kernel, view_num=view_num, C=C, inv_view=1.0 / view_num)

    fused_padded = pl.pallas_call(
        kernel,
        out_shape=jax.ShapeDtypeStruct((padded_chunk, C), features.dtype),
        grid_spec=pltpu.PrefetchScalarGridSpec(
            num_scalar_prefetch=0,
            grid=(n_tiles,),
            in_specs=[
                pl.BlockSpec((tile_chunk, view_num * C), lambda i: (i, 0)),
            ],
            out_specs=pl.BlockSpec((tile_chunk, C), lambda i: (i, 0)),
        ),
        compiler_params=pltpu.CompilerParams(
            dimension_semantics=("parallel",),
            vmem_limit_bytes=32 * 1024 * 1024,
        ),
    )(x2d)

    fused = (fused_padded[:chunk_size]
             if padded_chunk != chunk_size else fused_padded)

    # pid selection: pure indexing / glue (no arithmetic), keep in plain JAX.
    fused_pids = pids.reshape(chunk_size, view_num)[:, 0]
    return fused, fused_pids


if __name__ == "__main__":
    view_num = 4
    chunk_size = 8
    C = 32
    size = chunk_size * view_num  # 32

    key = jax.random.PRNGKey(0)
    kf, kp = jax.random.split(key)
    features = jax.random.normal(kf, (size, C), dtype=jnp.float32)
    # pids are identical within each view-group (as in re-id training batches)
    base_pids = jax.random.randint(kp, (chunk_size,), 0, 100, dtype=jnp.int32)
    pids = jnp.repeat(base_pids, view_num)

    fused_feats, fused_pids = multiview_feature_fusion(features, pids, view_num)
    fused_feats = jax.block_until_ready(fused_feats)
    fused_pids = jax.block_until_ready(fused_pids)

    # reference check
    ref_feats = features.reshape(chunk_size, view_num, C).mean(axis=1)
    ref_pids = pids.reshape(chunk_size, view_num)[:, 0]
    assert jnp.allclose(fused_feats, ref_feats, atol=1e-6), "feature mismatch"
    assert jnp.array_equal(fused_pids, ref_pids), "pid mismatch"

    print("KERNEL_OK")
</pallas_src>

<mosaic_0001>
module attributes {stable_mosaic.version = 11 : i64} {
  func.func @_fusion_kernel(%arg0: i32, %arg1: memref<8x128xf32, #tpu.memory_space<vmem>>, %arg2: memref<8x32xf32, #tpu.memory_space<vmem>>) attributes {dimension_semantics = [#tpu.dimension_semantics<parallel>], iteration_bounds = array<i64: 1>, scalar_prefetch = 0 : i64, scratch_operands = 0 : i64, tpu.core_type = #tpu.core_type<tc>, window_params = [{transform_indices = @transform_0, window_bounds = array<i64: 8, 128>}, {transform_indices = @transform_1, window_bounds = array<i64: 8, 32>}]} {
    %c0 = arith.constant 0 : index
    %c0_0 = arith.constant 0 : index
    %0 = vector.load %arg1[%c0, %c0_0] : memref<8x128xf32, #tpu.memory_space<vmem>>, vector<8x32xf32>
    %c0_1 = arith.constant 0 : index
    %c32 = arith.constant 32 : index
    %1 = vector.load %arg1[%c0_1, %c32] : memref<8x128xf32, #tpu.memory_space<vmem>>, vector<8x32xf32>
    %2 = arith.addf %0, %1 : vector<8x32xf32>
    %c0_2 = arith.constant 0 : index
    %c64 = arith.constant 64 : index
    %3 = vector.load %arg1[%c0_2, %c64] : memref<8x128xf32, #tpu.memory_space<vmem>>, vector<8x32xf32>
    %4 = arith.addf %2, %3 : vector<8x32xf32>
    %c0_3 = arith.constant 0 : index
    %c96 = arith.constant 96 : index
    %5 = vector.load %arg1[%c0_3, %c96] : memref<8x128xf32, #tpu.memory_space<vmem>>, vector<8x32xf32>
    %6 = arith.addf %4, %5 : vector<8x32xf32>
    %cst = arith.constant 2.500000e-01 : f32
    %7 = vector.broadcast %cst : f32 to vector<8x32xf32>
    %8 = arith.mulf %6, %7 : vector<8x32xf32>
    %c0_4 = arith.constant 0 : index
    %c0_5 = arith.constant 0 : index
    %9 = vector.load %arg2[%c0_4, %c0_5] : memref<8x32xf32, #tpu.memory_space<vmem>>, vector<8x32xf32>
    tpu.vector_store %arg2[%c0_4, %c0_5], %8 {strides = array<i32>} : memref<8x32xf32, #tpu.memory_space<vmem>>, vector<8x32xf32>,
    return
  }
  func.func @transform_0(%arg0: i32) -> (i32, i32) {
    %c0_i32 = arith.constant 0 : i32
    %c0_i32_0 = arith.constant 0 : i32
    return %arg0, %c0_i32 : i32, i32
  }
  func.func @transform_1(%arg0: i32) -> (i32, i32) {
    %c0_i32 = arith.constant 0 : i32
    %c0_i32_0 = arith.constant 0 : i32
    return %arg0, %c0_i32 : i32, i32
  }
}

</mosaic_0001>

<llo_original>
// kernel: tpu_custom_call.1
$region0: #{tpu_custom_call.1}
  #allocation0 [shape = 'u32[]', space=smem, size = 0x4, offset = 0x4, fixed_abs, tag = 'smem constant byte address 0x4 - core index']
  #allocation1 [shape = 'u32[72,128]{1,0:T(1,128)}', space=vmem, size = 0x9000, scoped, tag = 'internal scratch']
  %s0 = inlined_call_operand.hbm [shape: f32[8,128], index: 0, kind: input, shape index: {}]
  %s1 = inlined_call_operand.hbm [shape: f32[8,32], index: 1, kind: output, shape index: {}]
  %s2 = sld [smem:[#allocation0]]
  $region18: #{tpu_custom_call.1} parent=0
    _
  %s4 = ssub.s32 1, %s2
  %s5 = scalar_select 0, %s4, %s2
  $region1: #{tpu_custom_call.1} parent=0
    #allocation2 [shape = 'u8[4096]{0}', space=vmem, size = 0x1000, scoped, tag = 'input window, operand 0, single buffered']
    #allocation3 [shape = 's32[1]{0}', space=sflag, size = 0x4, scoped, tag = 'scoped memory for tpu_custom_call.1']
    #allocation4 [shape = 's32[1]{0}', space=sflag, size = 0x4, scoped, tag = 'scoped memory for tpu_custom_call.1']
    #allocation5 [shape = 'u8[4096]{0}', space=vmem, size = 0x1000, scoped, tag = 'output window, operand 0, single buffered']
    %6 = vsyncpa [#allocation3], 0
    %7 = vsyncpa [#allocation4], 0
    // Predicated region
    $region2: #{tpu_custom_call.1} parent=1 // pred_check
      _
    $region3: #{tpu_custom_call.1} parent=1 // pred_check_branch
      %9 = sbr.rel (0) target = $region5
    $region4: #{tpu_custom_call.1} parent=1 // pred_region
      %11 = vsyncadd [#allocation3], 0
      %s13 = sshll.u32 %s0, 4
      %s14 = int_to_ptr.hbm [resolvable:$true] %s13
      %s15 = sshll.u32 [#allocation2], 4
      %s16 = int_to_ptr.vmem [resolvable:$true] %s15
      %18 = dma.hbm_to_vmem [thread:$0]  %s14, 128, %s16, [#allocation3]
    $region5: #{tpu_custom_call.1} parent=1 // pred_fallthru
      _
    // Predicated region
    $region6: #{tpu_custom_call.1} parent=1 // pred_check
      _
    $region7: #{tpu_custom_call.1} parent=1 // pred_check_branch
      %20 = sbr.rel (0) target = $region9
    $region8: #{tpu_custom_call.1} parent=1 // pred_region
      %22 = dma.done [#allocation3], 128
    $region9: #{tpu_custom_call.1} parent=1 // pred_fallthru
      _
    %v23 = vld [vmem:[#allocation2] sm:$0xff]
    %25 = vrot.lane.b32.xlu0 %v23, 96
    %v26 = vpop.permute.xlu0 %25
    %v28 = vadd.f32 %v23, %v26
    %29 = vrot.lane.b32.xlu0 %v23, 64
    %v30 = vpop.permute.xlu0 %29
    %v32 = vadd.f32 %v28, %v30
    %33 = vrot.lane.b32.xlu0 %v23, 32
    %v34 = vpop.permute.xlu0 %33
    %v36 = vadd.f32 %v32, %v34
    %v37 = vmul.f32 %v36, 0.25
    %vm38 = vcmask 261120
    %39 = vst.msk [vmem:[#allocation5] sm:$0xff] %vm38, %v37
    // Predicated region
    $region10: #{tpu_custom_call.1} parent=1 // pred_check
      _
    $region11: #{tpu_custom_call.1} parent=1 // pred_check_branch
      %41 = sbr.rel (0) target = $region13
    $region12: #{tpu_custom_call.1} parent=1 // pred_region
      %43 = vsyncadd [#allocation4], 0
      %s45 = sshll.u32 [#allocation5], 4
      %s46 = int_to_ptr.vmem [resolvable:$true] %s45
      %s47 = sshll.u32 %s1, 4
      %s48 = int_to_ptr.hbm [resolvable:$true] %s47
      %50 = dma.vmem_to_hbm [thread:$0]  %s46, 128, %s48, [#allocation4]
    $region13: #{tpu_custom_call.1} parent=1 // pred_fallthru
      _
    // Predicated region
    $region14: #{tpu_custom_call.1} parent=1 // pred_check
      _
    $region15: #{tpu_custom_call.1} parent=1 // pred_check_branch
      %52 = sbr.rel (0) target = $region17
    $region16: #{tpu_custom_call.1} parent=1 // pred_region
      %54 = dma.done [#allocation4], 128
    $region17: #{tpu_custom_call.1} parent=1 // pred_fallthru
      _
    %55 = vsyncpa [#allocation3], 1
    %56 = vsyncpa [#allocation4], 1

</llo_original>
